<compile_context>
chip_gen: v7x
topology: tpu7x:2x2x1
jax: 0.10.0
libtpu: 0.0.40
codegen_flags: <defaults>
</compile_context>

<pallas_src>
import math

import jax
import jax.numpy as jnp
from jax import lax
from jax.experimental import pallas as pl
from jax.experimental.pallas import tpu as pltpu


def _gumbel_noise(key, shape, eps=1e-8):
    """torch-style Gumbel noise: -log(-log(U + eps) + eps), U ~ Uniform[0, 1)."""
    u = jax.random.uniform(key, shape, dtype=jnp.float32)
    return -jnp.log(-jnp.log(u + eps) + eps)


def _make_lwta_kernel(*, R, TR, U, HWp, out_dtype):
    """LWTA kernel for static geometry: R rows total, TR rows per tile,
    U competing units, each a lane-aligned slab of HWp (multiple of 128)."""
    log_U = math.log(float(U))                    # == -log p,  p = 1/U
    needs_row_mask = (R % TR) != 0                # partial last tile

    def kernel(inv_temp_ref, x_ref, g_ref, out_ref, kl_ref):
        i = pl.program_id(0)
        inv_t = inv_temp_ref[0]

        x = x_ref[...].astype(jnp.float32)        # (TR, U*HWp)
        g = g_ref[...]                            # f32 Gumbel noise

        if U == 2:
            # 2-way softmax == sigmoid of the (temperature-scaled) logit diff.
            sl0 = slice(0, HWp)
            sl1 = slice(HWp, 2 * HWp)
            x0, x1 = x[:, sl0], x[:, sl1]
            d = ((x1 - x0) + (g[:, sl1] - g[:, sl0])) * inv_t
            q1 = jax.nn.sigmoid(d)
            q0 = 1.0 - q1
            out_ref[:, sl0] = (x0 * q0).astype(out_dtype)
            out_ref[:, sl1] = (x1 * q1).astype(out_dtype)
            # KL(q || uniform) = log2 + q0 log q0 + q1 log q1
            #                  = log2 - softplus(-d) - q0 * d
            sp_neg_d = jnp.maximum(-d, 0.0) + jnp.log(1.0 + jnp.exp(-jnp.abs(d)))
            kl_elem = log_U - sp_neg_d - q0 * d
        else:
            t = (x + g) * inv_t
            ts = [t[:, k * HWp:(k + 1) * HWp] for k in range(U)]
            m = ts[0]
            for k in range(1, U):
                m = jnp.maximum(m, ts[k])
            ds = [tk - m for tk in ts]            # shifted logits, reused below
            es = [jnp.exp(dk) for dk in ds]
            s = es[0]
            for k in range(1, U):
                s = s + es[k]
            # TODO(synk): pl.reciprocal(s, approx=True) on real TPUs (EUP slot).
            inv_s = 1.0 / s
            log_s = jnp.log(s)
            qd = jnp.zeros_like(s)
            for k in range(U):
                q = es[k] * inv_s
                sl = slice(k * HWp, (k + 1) * HWp)
                out_ref[:, sl] = (x[:, sl] * q).astype(out_dtype)
                qd = qd + q * ds[k]
            # sum_k q_k (log q_k - log p) = (sum_k q_k d_k) - log s + log U
            kl_elem = qd - log_s + log_U

        if needs_row_mask:
            rows = i * TR + lax.broadcasted_iota(jnp.int32, (TR, 1), 0)
            kl_elem = jnp.where(rows < R, kl_elem, 0.0)

        # Per-tile KL partial broadcast across one lane-dense (1, 128) row.
        kl_ref[...] = jnp.broadcast_to(jnp.sum(kl_elem), (1, 128))

    return kernel


def _pick_block_rows(R, row_elems, itemsize, budget_bytes=2 << 20):
    """Rows per tile.  `budget_bytes` bounds the x input tile; total VMEM is
    roughly 2x(x) + 2x(g, f32) + 2x(out) + ~5x f32 temporaries, so a 2 MiB f32
    x-tile stays comfortably under the 48 MiB limit below (v7x: 64 MiB/TC)."""
    row_bytes = row_elems * itemsize
    tr = max(1, budget_bytes // max(1, row_bytes))
    sub = 8 * max(1, 4 // itemsize)               # 8 (f32) / 16 (bf16) sublanes
    if R > 2 * sub:
        # v7x megacore: keep >= 2 grid tiles so "parallel" spans both cores.
        half = -(-R // 2)
        half = -(-half // sub) * sub
        tr = min(tr, half)
    tr = min(tr, R)
    if tr < R:
        tr = max(sub, (tr // sub) * sub)
    return tr


def lwta_forward(x_nchw, temp_param, noise_key, *, U=2, training=True,
                 temp_test=0.01):
    """Mirrors LWTA.forward for a 4-D NCHW input.  Returns (out, kl)."""
    N, C, H, W = x_nchw.shape
    assert C % U == 0, "channel dim must be divisible by U"
    R, HW = N * (C // U), H * W

    # Pure row-major reshape (no HBM copy for a standard NCHW layout): each row
    # holds the U competing units of one (sample, channel-group) as contiguous
    # HW slabs -- identical element order to torch.reshape([-1, C//U, U, H, W]).
    x_r = x_nchw.reshape(R, U * HW)
    g_r = _gumbel_noise(noise_key, (R, U * HW))

    # Lane alignment: each unit's slab must span whole 128-lane groups so that
    # intra-tile slices and stores stay unmasked/dense; otherwise pad HW.
    HWp = HW if HW % 128 == 0 else ((HW + 127) // 128) * 128
    if HWp != HW:
        pad = ((0, 0), (0, 0), (0, HWp - HW))
        x_k = jnp.pad(x_r.reshape(R, U, HW), pad).reshape(R, U * HWp)
        g_k = jnp.pad(g_r.reshape(R, U, HW), pad).reshape(R, U * HWp)
    else:
        x_k, g_k = x_r, g_r

    if training:
        temperature = jax.nn.softplus(jnp.asarray(temp_param, jnp.float32))
    else:
        temperature = jnp.float32(temp_test)
    inv_temp = (jnp.float32(1.0) / temperature).reshape(1).astype(jnp.float32)

    TR = _pick_block_rows(R, U * HWp, x_k.dtype.itemsize)
    num_tiles = -(-R // TR)

    kernel = _make_lwta_kernel(R=R, TR=TR, U=U, HWp=HWp, out_dtype=x_k.dtype)

    n_elem = R * U * HWp
    cost = pl.CostEstimate(
        flops=int(10 * n_elem),
        transcendentals=int(2 * n_elem),
        bytes_accessed=int((2 * x_k.dtype.itemsize + 4) * n_elem
                           + num_tiles * 128 * 4),
    )

    out_k, kl_parts = pl.pallas_call(
        kernel,
        grid=(num_tiles,),
        in_specs=[
            pl.BlockSpec(memory_space=pltpu.MemorySpace.SMEM),   # 1/temperature
            pl.BlockSpec((TR, U * HWp), lambda i: (i, 0)),       # x tile
            pl.BlockSpec((TR, U * HWp), lambda i: (i, 0)),       # gumbel tile
        ],
        out_specs=(
            pl.BlockSpec((TR, U * HWp), lambda i: (i, 0)),       # out tile
            pl.BlockSpec((1, 128), lambda i: (i, 0)),            # KL partials
        ),
        out_shape=(
            jax.ShapeDtypeStruct((R, U * HWp), x_k.dtype),
            jax.ShapeDtypeStruct((num_tiles, 128), jnp.float32),
        ),
        compiler_params=pltpu.CompilerParams(
            dimension_semantics=("parallel",),
            vmem_limit_bytes=48 * 1024 * 1024,
        ),
        cost_estimate=cost,
    )(inv_temp, x_k, g_k)

    if HWp != HW:
        out_r = out_k.reshape(R, U, HWp)[:, :, :HW].reshape(R, U * HW)
    else:
        out_r = out_k
    out = out_r.reshape(N, C, H, W)

    if training:
        # torch: sum over C//U, mean over (N, U, H, W), / 1000
        kl = jnp.sum(kl_parts[:, 0]) / jnp.float32(N * U * H * W) / 1000.0
    else:
        kl = jnp.float32(0.0)
    return out, kl


def _lwta_reference(x_nchw, temp_param, noise_key, *, U=2, training=True,
                    temp_test=0.01):
    """Pure-JAX replica of torch lwta_activation (4-D branch, hard=False),
    using the same noise stream as lwta_forward."""
    N, C, H, W = x_nchw.shape
    R, HW = N * (C // U), H * W
    g = _gumbel_noise(noise_key, (R, U * HW)).reshape(R, U, HW)
    x5 = x_nchw.astype(jnp.float32).reshape(R, U, HW)
    if training:
        temp = jax.nn.softplus(jnp.asarray(temp_param, jnp.float32))
    else:
        temp = jnp.float32(temp_test)
    t = (x5 + g) / temp
    q = jax.nn.softmax(t, axis=1)
    out = (x5 * q).astype(x_nchw.dtype).reshape(N, C, H, W)
    if training:
        kl_el = q * (jnp.log(q + 1e-8) - math.log(1.0 / U))
        kl = jnp.sum(kl_el) / jnp.float32(N * U * H * W) / 1000.0
    else:
        kl = jnp.float32(0.0)
    return out, kl


if __name__ == "__main__":
    key = jax.random.PRNGKey(0)
    k_x, k_n1, k_n2 = jax.random.split(key, 3)

    temp_param = jnp.float32(-0.01)  # LWTA.__init__: temp = Parameter(tensor(-0.01))

    # Case 1: lane-aligned spatial map (HW = 256).
    x1 = jax.random.normal(k_x, (2, 4, 16, 16), dtype=jnp.float32)
    out1, kl1 = lwta_forward(x1, temp_param, k_n1, U=2, training=True)
    jax.block_until_ready((out1, kl1))
    ref_out1, ref_kl1 = _lwta_reference(x1, temp_param, k_n1, U=2, training=True)

    assert out1.shape == x1.shape and out1.dtype == x1.dtype
    assert kl1.shape == ()
    assert float(jnp.max(jnp.abs(out1 - ref_out1))) < 2e-4
    assert abs(float(kl1) - float(ref_kl1)) < 1e-6 + 1e-3 * abs(float(ref_kl1))
    assert float(kl1) >= -1e-6                                  # KL(q||uniform) >= 0
    assert bool(jnp.all(jnp.abs(out1) <= jnp.abs(x1) + 1e-5))   # mask in (0, 1)

    # Case 2: unaligned spatial map (HW = 49) -> exercises the pad fallback.
    x2 = jax.random.normal(k_x, (2, 4, 7, 7), dtype=jnp.float32)
    out2, kl2 = lwta_forward(x2, temp_param, k_n2, U=2, training=True)
    jax.block_until_ready((out2, kl2))
    ref_out2, ref_kl2 = _lwta_reference(x2, temp_param, k_n2, U=2, training=True)

    assert out2.shape == x2.shape
    assert float(jnp.max(jnp.abs(out2 - ref_out2))) < 2e-4
    assert abs(float(kl2) - float(ref_kl2)) < 1e-6 + 1e-3 * abs(float(ref_kl2))

    print("KERNEL_OK")
</pallas_src>

<mosaic_0001>
module attributes {stable_mosaic.version = 11 : i64} {
  func.func @kernel(%arg0: i32, %arg1: memref<1xf32, #tpu.memory_space<smem>>, %arg2: memref<4x512xf32, #tpu.memory_space<vmem>>, %arg3: memref<4x512xf32, #tpu.memory_space<vmem>>, %arg4: memref<4x512xf32, #tpu.memory_space<vmem>>, %arg5: memref<1x128xf32, #tpu.memory_space<vmem>>) attributes {dimension_semantics = [#tpu.dimension_semantics<parallel>], iteration_bounds = array<i64: 1>, scalar_prefetch = 0 : i64, scratch_operands = 0 : i64, tpu.core_type = #tpu.core_type<tc>, window_params = [{transform_indices = @transform_0, window_bounds = array<i64: 1>}, {transform_indices = @transform_1, window_bounds = array<i64: 4, 512>}, {transform_indices = @transform_2, window_bounds = array<i64: 4, 512>}, {transform_indices = @transform_3, window_bounds = array<i64: 4, 512>}, {transform_indices = @transform_4, window_bounds = array<i64: 1, 128>}]} {
    %c0 = arith.constant 0 : index
    %0 = memref.load %arg1[%c0] : memref<1xf32, #tpu.memory_space<smem>>
    %c0_0 = arith.constant 0 : index
    %c0_1 = arith.constant 0 : index
    %1 = vector.load %arg2[%c0_0, %c0_1] : memref<4x512xf32, #tpu.memory_space<vmem>>, vector<4x512xf32>
    %c0_2 = arith.constant 0 : index
    %c0_3 = arith.constant 0 : index
    %2 = vector.load %arg3[%c0_2, %c0_3] : memref<4x512xf32, #tpu.memory_space<vmem>>, vector<4x512xf32>
    %3 = vector.extract_strided_slice %1 {offsets = [0, 0], sizes = [4, 256], strides = [1, 1]} : vector<4x512xf32> to vector<4x256xf32>
    %4 = vector.extract_strided_slice %1 {offsets = [0, 256], sizes = [4, 256], strides = [1, 1]} : vector<4x512xf32> to vector<4x256xf32>
    %5 = arith.subf %4, %3 : vector<4x256xf32>
    %6 = vector.extract_strided_slice %2 {offsets = [0, 256], sizes = [4, 256], strides = [1, 1]} : vector<4x512xf32> to vector<4x256xf32>
    %7 = vector.extract_strided_slice %2 {offsets = [0, 0], sizes = [4, 256], strides = [1, 1]} : vector<4x512xf32> to vector<4x256xf32>
    %8 = arith.subf %6, %7 : vector<4x256xf32>
    %9 = arith.addf %5, %8 : vector<4x256xf32>
    %10 = vector.broadcast %0 : f32 to vector<4x256xf32>
    %11 = arith.mulf %9, %10 : vector<4x256xf32>
    %12 = arith.negf %11 : vector<4x256xf32>
    %13 = math.exp %12 : vector<4x256xf32>
    %cst = arith.constant 1.000000e+00 : f32
    %14 = vector.broadcast %cst : f32 to vector<4x256xf32>
    %15 = arith.addf %14, %13 : vector<4x256xf32>
    %16 = arith.divf %14, %15 : vector<4x256xf32>
    %cst_4 = arith.constant 1.000000e+00 : f32
    %17 = vector.broadcast %cst_4 : f32 to vector<4x256xf32>
    %18 = arith.subf %17, %16 : vector<4x256xf32>
    %19 = arith.mulf %3, %18 : vector<4x256xf32>
    %c0_5 = arith.constant 0 : index
    %c0_6 = arith.constant 0 : index
    %20 = vector.load %arg4[%c0_5, %c0_6] : memref<4x512xf32, #tpu.memory_space<vmem>>, vector<4x256xf32>
    tpu.vector_store %arg4[%c0_5, %c0_6], %19 {strides = array<i32>} : memref<4x512xf32, #tpu.memory_space<vmem>>, vector<4x256xf32>,
    %21 = arith.mulf %4, %16 : vector<4x256xf32>
    %c0_7 = arith.constant 0 : index
    %c256 = arith.constant 256 : index
    %22 = vector.load %arg4[%c0_7, %c256] : memref<4x512xf32, #tpu.memory_space<vmem>>, vector<4x256xf32>
    tpu.vector_store %arg4[%c0_7, %c256], %21 {strides = array<i32>} : memref<4x512xf32, #tpu.memory_space<vmem>>, vector<4x256xf32>,
    %cst_8 = arith.constant 0.000000e+00 : f32
    %23 = vector.broadcast %cst_8 : f32 to vector<4x256xf32>
    %24 = arith.subf %23, %11 : vector<4x256xf32>
    %cst_9 = arith.constant 0.000000e+00 : f32
    %25 = vector.broadcast %cst_9 : f32 to vector<4x256xf32>
    %26 = arith.maximumf %24, %25 : vector<4x256xf32>
    %27 = math.absf %11 : vector<4x256xf32>
    %cst_10 = arith.constant 0.000000e+00 : f32
    %28 = vector.broadcast %cst_10 : f32 to vector<4x256xf32>
    %29 = arith.subf %28, %27 : vector<4x256xf32>
    %30 = math.exp %29 : vector<4x256xf32>
    %cst_11 = arith.constant 1.000000e+00 : f32
    %31 = vector.broadcast %cst_11 : f32 to vector<4x256xf32>
    %32 = arith.addf %31, %30 : vector<4x256xf32>
    %33 = math.log %32 : vector<4x256xf32>
    %34 = arith.addf %26, %33 : vector<4x256xf32>
    %cst_12 = arith.constant 0.693147182 : f32
    %35 = vector.broadcast %cst_12 : f32 to vector<4x256xf32>
    %36 = arith.subf %35, %34 : vector<4x256xf32>
    %37 = arith.mulf %18, %11 : vector<4x256xf32>
    %38 = arith.subf %36, %37 : vector<4x256xf32>
    %39 = vector.shape_cast %38 : vector<4x256xf32> to vector<1x4x256xf32>
    %cst_13 = arith.constant dense<0.000000e+00> : vector<1xf32>
    %40 = vector.multi_reduction <add>, %39, %cst_13 [1, 2] : vector<1x4x256xf32> to vector<1xf32>
    %41 = vector.shape_cast %40 : vector<1xf32> to vector<1x1x1xf32>
    %42 = vector.extract %41[0, 0, 0] : f32 from vector<1x1x1xf32>
    %43 = vector.broadcast %42 : f32 to vector<1x128xf32>
    %c0_14 = arith.constant 0 : index
    %c0_15 = arith.constant 0 : index
    %44 = vector.load %arg5[%c0_14, %c0_15] : memref<1x128xf32, #tpu.memory_space<vmem>>, vector<1x128xf32>
    tpu.vector_store %arg5[%c0_14, %c0_15], %43 {strides = array<i32>} : memref<1x128xf32, #tpu.memory_space<vmem>>, vector<1x128xf32>,
    return
  }
  func.func @transform_0(%arg0: i32) -> i32 {
    %c0_i32 = arith.constant 0 : i32
    %c0_i32_0 = arith.constant 0 : i32
    return %c0_i32 : i32
  }
  func.func @transform_1(%arg0: i32) -> (i32, i32) {
    %c0_i32 = arith.constant 0 : i32
    %c0_i32_0 = arith.constant 0 : i32
    return %arg0, %c0_i32 : i32, i32
  }
  func.func @transform_2(%arg0: i32) -> (i32, i32) {
    %c0_i32 = arith.constant 0 : i32
    %c0_i32_0 = arith.constant 0 : i32
    return %arg0, %c0_i32 : i32, i32
  }
  func.func @transform_3(%arg0: i32) -> (i32, i32) {
    %c0_i32 = arith.constant 0 : i32
    %c0_i32_0 = arith.constant 0 : i32
    return %arg0, %c0_i32 : i32, i32
  }
  func.func @transform_4(%arg0: i32) -> (i32, i32) {
    %c0_i32 = arith.constant 0 : i32
    %c0_i32_0 = arith.constant 0 : i32
    return %arg0, %c0_i32 : i32, i32
  }
}

</mosaic_0001>

<llo_original>
// kernel: tpu_custom_call.1
$region0: #{tpu_custom_call.1}
  #allocation0 [shape = 'u32[]', space=smem, size = 0x4, offset = 0x4, fixed_abs, tag = 'smem constant byte address 0x4 - core index']
  #allocation1 [shape = 'u32[144,128]{1,0:T(1,128)}', space=vmem, size = 0x12000, scoped, tag = 'internal scratch']
  #allocation2 [shape = 'f32[1]{0:T(128)S(6)}', space=smem, size = 0x200, scoped, tag = 'scoped memory for tpu_custom_call.1']
  %s0 = inlined_call_operand.<no memory space> [shape: f32[1], index: 0, kind: input, shape index: {}]
  %s1 = inlined_call_operand.hbm [shape: f32[4,512], index: 1, kind: input, shape index: {}]
  %s2 = inlined_call_operand.hbm [shape: f32[4,512], index: 2, kind: input, shape index: {}]
  %s3 = inlined_call_operand.hbm [shape: f32[4,512], index: 3, kind: output, shape index: {0}]
  %s4 = inlined_call_operand.hbm [shape: f32[1,128], index: 4, kind: output, shape index: {1}]
  %5 = xla_tuple %s3, %s4
  %s6 = sld [smem:[#allocation0]]
  $region38: #{tpu_custom_call.1} parent=0
    _
  %s8 = ssub.s32 1, %s6
  %s9 = scalar_select 0, %s8, %s6
  %10 = sst [smem:[#allocation2]] %s0
  $region1: #{tpu_custom_call.1} parent=0
    #allocation3 [shape = 'u8[8192]{0}', space=vmem, size = 0x2000, scoped, tag = 'input window, operand 1, single buffered']
    #allocation4 [shape = 's32[1]{0}', space=sflag, size = 0x4, scoped, tag = 'scoped memory for tpu_custom_call.1']
    #allocation5 [shape = 's32[1]{0}', space=sflag, size = 0x4, scoped, tag = 'scoped memory for tpu_custom_call.1']
    #allocation6 [shape = 'u8[8192]{0}', space=vmem, size = 0x2000, scoped, tag = 'input window, operand 2, single buffered']
    #allocation7 [shape = 's32[1]{0}', space=sflag, size = 0x4, scoped, tag = 'scoped memory for tpu_custom_call.1']
    #allocation8 [shape = 'u8[8192]{0}', space=vmem, size = 0x2000, scoped, tag = 'output window, operand 0, single buffered']
    #allocation9 [shape = 'u8[512]{0}', space=vmem, size = 0x400, scoped, tag = 'output window, operand 1, single buffered']
    #allocation10 [shape = 's32[1]{0}', space=sflag, size = 0x4, scoped, tag = 'scoped memory for tpu_custom_call.1']
    %11 = vsyncpa [#allocation4], 0
    %12 = vsyncpa [#allocation7], 0
    %13 = vsyncpa [#allocation5], 0
    %14 = vsyncpa [#allocation10], 0
    // Predicated region
    $region2: #{tpu_custom_call.1} parent=1 // pred_check
      _
    $region3: #{tpu_custom_call.1} parent=1 // pred_check_branch
      %16 = sbr.rel (0) target = $region5
    $region4: #{tpu_custom_call.1} parent=1 // pred_region
      _
    $region5: #{tpu_custom_call.1} parent=1 // pred_fallthru
      _
    // Predicated region
    $region6: #{tpu_custom_call.1} parent=1 // pred_check
      _
    $region7: #{tpu_custom_call.1} parent=1 // pred_check_branch
      %18 = sbr.rel (0) target = $region9
    $region8: #{tpu_custom_call.1} parent=1 // pred_region
      %s20 = ssub.s32 256, 256
      %21 = vsyncadd [#allocation4], %s20
      %s23 = sshll.u32 [#allocation3], 4
      %s24 = int_to_ptr.vmem [resolvable:$true] %s23
      %26 = dma.hbm_to_vmem [thread:$0]  %s1, 256, %s24, [#allocation4]
    $region9: #{tpu_custom_call.1} parent=1 // pred_fallthru
      _
    // Predicated region
    $region10: #{tpu_custom_call.1} parent=1 // pred_check
      _
    $region11: #{tpu_custom_call.1} parent=1 // pred_check_branch
      %28 = sbr.rel (0) target = $region13
    $region12: #{tpu_custom_call.1} parent=1 // pred_region
      %s30 = ssub.s32 256, 256
      %31 = vsyncadd [#allocation7], %s30
      %s33 = sshll.u32 [#allocation6], 4
      %s34 = int_to_ptr.vmem [resolvable:$true] %s33
      %36 = dma.hbm_to_vmem [thread:$0]  %s2, 256, %s34, [#allocation7]
    $region13: #{tpu_custom_call.1} parent=1 // pred_fallthru
      _
    // Predicated region
    $region14: #{tpu_custom_call.1} parent=1 // pred_check
      _
    $region15: #{tpu_custom_call.1} parent=1 // pred_check_branch
      %38 = sbr.rel (0) target = $region17
    $region16: #{tpu_custom_call.1} parent=1 // pred_region
      %39 = dma.done [#allocation4], 256
    $region17: #{tpu_custom_call.1} parent=1 // pred_fallthru
      _
    // Predicated region
    $region18: #{tpu_custom_call.1} parent=1 // pred_check
      _
    $region19: #{tpu_custom_call.1} parent=1 // pred_check_branch
      %41 = sbr.rel (0) target = $region21
    $region20: #{tpu_custom_call.1} parent=1 // pred_region
      %42 = dma.done [#allocation7], 256
    $region21: #{tpu_custom_call.1} parent=1 // pred_fallthru
      _
    %s43 = sld [smem:[#allocation2]]
    %v44 = vld [vmem:[#allocation3] sm:$0xff]
    %v45 = vld [vmem:[#allocation3 + $0x8] sm:$0xff]
    %v46 = vld [vmem:[#allocation6] sm:$0xff]
    %v47 = vld [vmem:[#allocation6 + $0x8] sm:$0xff]
    %v48 = vsub.f32 %v45, %v44
    %v49 = vsub.f32 %v47, %v46
    %v50 = vadd.f32 %v48, %v49
    %v51 = vstv %s43
    %v52 = vmul.f32 %v50, %v51
    %v53 = vxor.u32 %v52, 2147483648
    %v54 = vmul.f32 %v53, 1.442695
    %v55 = vpow.pop %v54
    %v56 = vadd.f32 %v55, 1.0
    %v57 = vrcp.pop %v56
    %v58 = vmul.f32 1.0, %v57
    %v59 = vsub.f32 1.0, %v58
    %v60 = vmul.f32 %v44, %v59
    %61 = vst [vmem:[#allocation8] sm:$0xff] %v60
    %v62 = vmul.f32 %v45, %v58
    %63 = vst [vmem:[#allocation8 + $0x8] sm:$0xff] %v62
    %v64 = vsub.f32 0.0, %v52
    %v65 = vmax.f32 %v64, 0.0
    %v66 = vand.u32 2147483647, %v52
    %v67 = vsub.f32 0.0, %v66
    %v68 = vmul.f32 %v67, 1.442695
    %v69 = vpow.pop %v68
    %v70 = vadd.f32 %v69, 1.0
    %v71 = vlog2.pop %v70
    %v72 = vmul.f32 %v71, 0.6931472
    %v73 = vadd.f32 %v65, %v72
    %v74 = vsub.f32 0.6931472, %v73
    %v75 = vmul.f32 %v59, %v52
    %v76 = vsub.f32 %v74, %v75
    %v78 = vcombine.high %v76, %v76
    %vm80 = vcmask 1043456
    %v81 = vsel %vm80, %v76, 0.0
    %v82 = vsel %vm80, %v78, 0.0
    %v83 = vadd.f32 %v81, %v82
    %84 = vadd.xlane.f32.xlu0 %v83
    %v85 = vpop.xlane.xlu0 %84
    %v86 = vrot.slane %v85, 4
    %v87 = vadd.f32 %v85, %v86
    %v88 = vrot.slane %v87, 2
    %v89 = vadd.f32 %v87, %v88
    %v90 = vrot.slane %v89, 1
    %v91 = vadd.f32 %v89, %v90
    %s92 = vtos %v91
    %v93 = vstv %s92
    %94 = vst [vmem:[#allocation9] sm:$0x1] %v93
    // Predicated region
    $region22: #{tpu_custom_call.1} parent=1 // pred_check
      _
    $region23: #{tpu_custom_call.1} parent=1 // pred_check_branch
      %96 = sbr.rel (0) target = $region25
    $region24: #{tpu_custom_call.1} parent=1 // pred_region
      %s98 = ssub.s32 256, 256
      %99 = vsyncadd [#allocation5], %s98
      %s101 = sshll.u32 [#allocation8], 4
      %s102 = int_to_ptr.vmem [resolvable:$true] %s101
      %104 = dma.vmem_to_hbm [thread:$0]  %s102, 256, %s3, [#allocation5]
    $region25: #{tpu_custom_call.1} parent=1 // pred_fallthru
      _
    // Predicated region
    $region26: #{tpu_custom_call.1} parent=1 // pred_check
      _
    $region27: #{tpu_custom_call.1} parent=1 // pred_check_branch
      %106 = sbr.rel (0) target = $region29
    $region28: #{tpu_custom_call.1} parent=1 // pred_region
      %s108 = ssub.s32 16, 16
      %109 = vsyncadd [#allocation10], %s108
      %s111 = sshll.u32 [#allocation9], 4
      %s112 = int_to_ptr.vmem [resolvable:$true] %s111
      %114 = dma.vmem_to_hbm [thread:$0]  %s112, 16, %s4, [#allocation10]
    $region29: #{tpu_custom_call.1} parent=1 // pred_fallthru
      _
    // Predicated region
    $region30: #{tpu_custom_call.1} parent=1 // pred_check
      _
    $region31: #{tpu_custom_call.1} parent=1 // pred_check_branch
      %116 = sbr.rel (0) target = $region33
    $region32: #{tpu_custom_call.1} parent=1 // pred_region
      %117 = dma.done [#allocation5], 256
    $region33: #{tpu_custom_call.1} parent=1 // pred_fallthru
      _
    // Predicated region
    $region34: #{tpu_custom_call.1} parent=1 // pred_check
      _
    $region35: #{tpu_custom_call.1} parent=1 // pred_check_branch
      %119 = sbr.rel (0) target = $region37
    $region36: #{tpu_custom_call.1} parent=1 // pred_region
      %120 = dma.done [#allocation10], 16
    $region37: #{tpu_custom_call.1} parent=1 // pred_fallthru
      _
    %121 = vsyncpa [#allocation4], 1
    %122 = vsyncpa [#allocation7], 1
    %123 = vsyncpa [#allocation5], 1
    %124 = vsyncpa [#allocation10], 1

</llo_original>
